<compile_context>
chip_gen: v7x
topology: tpu7x:2x2x1
jax: 0.10.0
libtpu: 0.0.40
codegen_flags: <defaults>
</compile_context>

<pallas_src>
import functools

import jax
import jax.numpy as jnp
from jax import lax
from jax.experimental import pallas as pl
from jax.experimental.pallas import tpu as pltpu


def _dense_block_kernel(x_ref, w_ref, b_ref, o_ref, xz_ref, patch_ref, *, W, P):
    # x_ref    : (bn, Cin, H*W)           flattened NCHW images (pixels on lanes)
    # w_ref    : (Cout, 9*Cpad)           fused 3x3 weights, col = tap*Cpad + c (zero-padded K)
    # b_ref    : (Cout, 1)                bias (f32)
    # o_ref    : (bn, Cin+Cout, H*W)      fused cat([x, relu(conv(x))], channel dim)
    # xz_ref   : (Cpad, bn*H*W + 2*P)     flat image strip with a P-lane halo (VMEM scratch)
    # patch_ref: (9*Cpad, bn*H*W)         fused im2col patch (VMEM scratch)
    BN, Cin, HW = x_ref.shape
    Cpad = xz_ref.shape[0]
    Cout = w_ref.shape[0]
    BHW = BN * HW
    cdtype = patch_ref.dtype

    # ---- hoisted constants: pre-broadcast border masks + one zero block -------
    # (JAX does not CSE broadcast_in_dim, so build these once, outside all loops.)
    idx = lax.broadcasted_iota(jnp.int32, (Cpad, BHW), 1)
    col = idx % W                       # column within the image row
    pix = idx % HW                      # pixel index within its image
    not_left = col >= 1                 # tap may look one pixel left
    not_right = col <= W - 2            # tap may look one pixel right
    not_top = pix >= W                  # tap may look one row up (also kills cross-image reads)
    not_bot = pix < HW - W              # tap may look one row down
    zblk = jnp.zeros((Cpad, BHW), dtype=xz_ref.dtype)

    # The sublane-padding rows (Cin..Cpad) feed zero weight columns, but must hold
    # finite values (0 * NaN = NaN in the accumulator), so zero them each step.
    if Cpad > Cin:
        xz_ref[Cin:Cpad, :] = jnp.zeros((Cpad - Cin, xz_ref.shape[1]),
                                        dtype=xz_ref.dtype)

    # ---- stage the whole batch block as one flat image strip (lane-aligned) ----
    # x is loaded exactly once per image and reused for the passthrough channels.
    # For production channel counts (Cin % 8 == 0, Cout % 8 == 0) both output
    # stores below are tile-aligned and unmasked.
    for b in range(BN):
        xv = x_ref[b]                                        # (Cin, HW)
        xz_ref[:Cin, P + b * HW:P + (b + 1) * HW] = xv       # P, HW are multiples of 128
        o_ref[b, :Cin, :] = xv                               # cat([x, .]) passthrough

    # ---- im2col over the whole batch block: 9 aligned, full-tile patch writes ---
    # The halo region is never read unmasked (every read that can land in it is
    # killed by not_left/right/top/bot), so it needs no zero fill.
    for dy in range(3):
        for dx in range(3):
            tap = dy * 3 + dx
            off = (dy - 1) * W + (dx - 1)
            sl = xz_ref[:, P + off:P + off + BHW]            # (Cpad, BHW) shifted view
            m = None
            if dy == 0:
                m = not_top
            elif dy == 2:
                m = not_bot
            if dx == 0:
                m = not_left if m is None else m & not_left
            elif dx == 2:
                m = not_right if m is None else m & not_right
            if m is not None:
                sl = jnp.where(m, sl, zblk)
            patch_ref[tap * Cpad:(tap + 1) * Cpad, :] = sl.astype(cdtype)

    # ---- one fused MXU matmul for the whole batch block + bias/ReLU epilogue ----
    acc = jnp.dot(w_ref[...], patch_ref[...], preferred_element_type=jnp.float32)
    y = jnp.maximum(acc + b_ref[...], 0.0)                   # (Cout, BHW), f32

    # ---- lane-dense conv-channel stores (one 256*bn-lane aligned slice / image) --
    for b in range(BN):
        o_ref[b, Cin:Cin + Cout, :] = y[:, b * HW:(b + 1) * HW].astype(o_ref.dtype)


def _round_up(x, m):
    return (x + m - 1) // m * m


def _tpu_generation_budget():
    """(scoped-VMEM byte budget, TensorCores per chip) for the local TPU generation."""
    kind = ""
    try:
        kind = jax.devices()[0].device_kind.lower()
    except Exception:
        pass
    if "v5e" in kind or "v5 lite" in kind or "v5lite" in kind:
        return 16 << 20, 1      # v5e: 16 MiB default scoped VMEM, single TensorCore
    if "v7" in kind:
        return 24 << 20, 2      # v7x: 64 MiB physical VMEM (keep headroom), 2 TensorCores
    return 32 << 20, 1          # v6e & default: 32 MiB scoped VMEM, single TensorCore


_MAX_BATCH_BLOCK = 8            # bounds the unrolled per-image staging/store loops


def _pick_batch_block(n, step_bytes, budget, num_tc):
    """Largest batch block that fits the VMEM budget and keeps the grid pipelined."""
    fits = [d for d in range(1, min(n, _MAX_BATCH_BLOCK) + 1)
            if n % d == 0 and step_bytes(d) <= budget // 2]
    if not fits:
        return 1
    # Prefer >= 2 grid steps per TensorCore (DMA/compute overlap), sharded evenly.
    good = [d for d in fits if (n // d) >= 2 * num_tc and (n // d) % num_tc == 0]
    if good:
        return max(good)
    even = [d for d in fits if (n // d) % num_tc == 0]
    return max(even) if even else max(fits)


def dense_block_forward(x_nchw, w_taps, bias, *, batch_block=None, conv_dtype=None):
    """y = cat([x, relu(conv3x3_pad1(x))], dim=1), x in NCHW.

    x_nchw: (N, Cin, H, W); w_taps: (3, 3, Cin, Cout); bias: (Cout,).
    conv_dtype: optional MXU input dtype for the conv matmul (e.g. jnp.bfloat16);
      defaults to the input dtype, so bf16 activations use the bf16-native MXU.
    """
    N, Cin, H, W = x_nchw.shape
    Cout = w_taps.shape[-1]
    HW = H * W
    Cpad = _round_up(Cin, 8)               # tile-aligned tap rows in the im2col patch
    P = _round_up(W + 1, 128)              # halo >= W+1, multiple of 128 => aligned staging
    cdtype = jnp.dtype(conv_dtype) if conv_dtype is not None else jnp.dtype(x_nchw.dtype)
    itemsize = jnp.dtype(x_nchw.dtype).itemsize

    # Free / contiguous HBM reshape of x; tiny weight repack with the K dim padded
    # to 9*Cpad so in-kernel tap writes are full 8-sublane tiles (padded cols = 0).
    x_flat = x_nchw.reshape(N, Cin, HW)
    w_r = jnp.transpose(w_taps, (3, 0, 1, 2))               # (Cout, 3, 3, Cin)
    if Cpad != Cin:
        w_r = jnp.pad(w_r, ((0, 0), (0, 0), (0, 0), (0, Cpad - Cin)))
    w2 = w_r.reshape(Cout, 9 * Cpad).astype(cdtype)          # col = tap*Cpad + c
    b2 = bias.reshape(Cout, 1).astype(jnp.float32)

    budget, num_tc = _tpu_generation_budget()

    def step_bytes(bn):
        io = 2 * (Cin + Cin + Cout) * bn * HW * itemsize     # double-buffered in + out blocks
        xz = Cpad * (bn * HW + 2 * P) * itemsize
        patch = 9 * Cpad * bn * HW * jnp.dtype(cdtype).itemsize
        wgt = Cout * 9 * Cpad * jnp.dtype(cdtype).itemsize + Cout * 4
        return io + xz + patch + wgt

    bn = batch_block if batch_block is not None else _pick_batch_block(
        N, step_bytes, budget, num_tc)
    assert 1 <= bn <= N and N % bn == 0, (bn, N)

    vmem_limit = int(max(8 << 20,
                         min(budget, 2 * step_bytes(bn)),
                         step_bytes(bn) + (2 << 20)))

    flops = 2 * N * Cout * 9 * Cin * HW
    bytes_accessed = int((Cin + Cin + Cout) * N * HW * itemsize
                         + w2.size * w2.dtype.itemsize + b2.size * 4)

    kernel = functools.partial(_dense_block_kernel, W=W, P=P)
    out_flat = pl.pallas_call(
        kernel,
        out_shape=jax.ShapeDtypeStruct((N, Cin + Cout, HW), x_nchw.dtype),
        grid=(N // bn,),
        in_specs=[
            pl.BlockSpec((bn, Cin, HW), lambda n: (n, 0, 0)),
            pl.BlockSpec((Cout, 9 * Cpad), lambda n: (0, 0)),    # VMEM-resident weights
            pl.BlockSpec((Cout, 1), lambda n: (0, 0)),           # VMEM-resident bias
        ],
        out_specs=pl.BlockSpec((bn, Cin + Cout, HW), lambda n: (n, 0, 0)),
        scratch_shapes=[
            pltpu.VMEM((Cpad, bn * HW + 2 * P), x_nchw.dtype),   # flat image strip + halo
            pltpu.VMEM((9 * Cpad, bn * HW), cdtype),             # fused im2col patch
        ],
        compiler_params=pltpu.CompilerParams(
            dimension_semantics=("parallel",),
            vmem_limit_bytes=vmem_limit),
        cost_estimate=pl.CostEstimate(
            flops=flops, transcendentals=0, bytes_accessed=bytes_accessed),
    )(x_flat, w2, b2)

    # Free reshape back to NCHW spatial layout.
    return out_flat.reshape(N, Cin + Cout, H, W)


def _reference(x_nchw, w_taps, bias):
    # pure-JAX reference (XLA conv) for the correctness check
    w_oihw = jnp.transpose(w_taps, (3, 2, 0, 1))     # (Cout, Cin, 3, 3)
    y = lax.conv_general_dilated(
        x_nchw, w_oihw, window_strides=(1, 1), padding=((1, 1), (1, 1)),
        dimension_numbers=("NCHW", "OIHW", "NCHW"))
    y = jnp.maximum(y + bias[None, :, None, None], 0.0)
    return jnp.concatenate([x_nchw, y], axis=1)


if __name__ == "__main__":
    # small shapes consistent with the module: batch=2, in_channels=4,
    # addition_channels=8, spatial 16x16
    N, Cin, Cout, H, W = 2, 4, 8, 16, 16

    key = jax.random.PRNGKey(0)
    kx, kw, kb = jax.random.split(key, 3)
    x = jax.random.normal(kx, (N, Cin, H, W), dtype=jnp.float32)
    # deterministic synthetic conv parameters (Conv2d(Cin, Cout, 3, 1, 1))
    w = 0.1 * jax.random.normal(kw, (3, 3, Cin, Cout), dtype=jnp.float32)
    b = 0.1 * jax.random.normal(kb, (Cout,), dtype=jnp.float32)

    out = jax.block_until_ready(dense_block_forward(x, w, b))
    ref = jax.block_until_ready(_reference(x, w, b))

    assert out.shape == (N, Cin + Cout, H, W)
    err = float(jnp.max(jnp.abs(out - ref)))
    assert err < 1e-4, f"max abs err {err}"
    print("KERNEL_OK")
</pallas_src>

<mosaic_0001>
module attributes {stable_mosaic.version = 11 : i64} {
  func.func @_dense_block_kernel(%arg0: i32, %arg1: memref<1x4x256xf32, #tpu.memory_space<vmem>>, %arg2: memref<8x72xf32, #tpu.memory_space<vmem>>, %arg3: memref<8x1xf32, #tpu.memory_space<vmem>>, %arg4: memref<1x12x256xf32, #tpu.memory_space<vmem>>, %arg5: memref<8x512xf32, #tpu.memory_space<vmem>>, %arg6: memref<72x256xf32, #tpu.memory_space<vmem>>) attributes {dimension_semantics = [#tpu.dimension_semantics<parallel>], iteration_bounds = array<i64: 2>, scalar_prefetch = 0 : i64, scratch_operands = 2 : i64, tpu.core_type = #tpu.core_type<tc>, window_params = [{transform_indices = @transform_0, window_bounds = array<i64: 1, 4, 256>}, {pipeline_mode = #tpu.pipeline_mode<synchronous>, transform_indices = @transform_1, window_bounds = array<i64: 8, 72>}, {pipeline_mode = #tpu.pipeline_mode<synchronous>, transform_indices = @transform_2, window_bounds = array<i64: 8, 1>}, {transform_indices = @transform_3, window_bounds = array<i64: 1, 12, 256>}]} {
    %0 = tpu.iota {dimensions = array<i32: 1>} : vector<8x256xi32>
    %c16_i32 = arith.constant 16 : i32
    %c0_i32 = arith.constant 0 : i32
    %1 = arith.cmpi eq, %c16_i32, %c0_i32 : i32
    %c1_i32 = arith.constant 1 : i32
    %2 = arith.select %1, %c1_i32, %c16_i32 : i32
    %3 = vector.broadcast %2 : i32 to vector<8x256xi32>
    %4 = arith.remsi %0, %3 : vector<8x256xi32>
    %c0_i32_0 = arith.constant 0 : i32
    %5 = vector.broadcast %c0_i32_0 : i32 to vector<8x256xi32>
    %6 = arith.cmpi ne, %4, %5 : vector<8x256xi32>
    %c0_i32_1 = arith.constant 0 : i32
    %7 = vector.broadcast %c0_i32_1 : i32 to vector<8x256xi32>
    %8 = arith.cmpi slt, %4, %7 : vector<8x256xi32>
    %c0_i32_2 = arith.constant 0 : i32
    %9 = arith.cmpi slt, %2, %c0_i32_2 : i32
    %10 = vector.broadcast %9 : i1 to vector<8x256xi1>
    %11 = vector.broadcast %10 : vector<8x256xi1> to vector<8x256xi1>
    %12 = arith.xori %8, %11 : vector<8x256xi1>
    %13 = arith.andi %12, %6 : vector<8x256xi1>
    %14 = vector.broadcast %2 : i32 to vector<8x256xi32>
    %15 = arith.addi %4, %14 : vector<8x256xi32>
    %16 = arith.select %13, %15, %4 : vector<8x256xi1>, vector<8x256xi32>
    %c256_i32 = arith.constant 256 : i32
    %c0_i32_3 = arith.constant 0 : i32
    %17 = arith.cmpi eq, %c256_i32, %c0_i32_3 : i32
    %c1_i32_4 = arith.constant 1 : i32
    %18 = arith.select %17, %c1_i32_4, %c256_i32 : i32
    %19 = vector.broadcast %18 : i32 to vector<8x256xi32>
    %20 = arith.remsi %0, %19 : vector<8x256xi32>
    %c0_i32_5 = arith.constant 0 : i32
    %21 = vector.broadcast %c0_i32_5 : i32 to vector<8x256xi32>
    %22 = arith.cmpi ne, %20, %21 : vector<8x256xi32>
    %c0_i32_6 = arith.constant 0 : i32
    %23 = vector.broadcast %c0_i32_6 : i32 to vector<8x256xi32>
    %24 = arith.cmpi slt, %20, %23 : vector<8x256xi32>
    %c0_i32_7 = arith.constant 0 : i32
    %25 = arith.cmpi slt, %18, %c0_i32_7 : i32
    %26 = vector.broadcast %25 : i1 to vector<8x256xi1>
    %27 = vector.broadcast %26 : vector<8x256xi1> to vector<8x256xi1>
    %28 = arith.xori %24, %27 : vector<8x256xi1>
    %29 = arith.andi %28, %22 : vector<8x256xi1>
    %30 = vector.broadcast %18 : i32 to vector<8x256xi32>
    %31 = arith.addi %20, %30 : vector<8x256xi32>
    %32 = arith.select %29, %31, %20 : vector<8x256xi1>, vector<8x256xi32>
    %c1_i32_8 = arith.constant 1 : i32
    %33 = vector.broadcast %c1_i32_8 : i32 to vector<8x256xi32>
    %34 = arith.cmpi sge, %16, %33 : vector<8x256xi32>
    %c14_i32 = arith.constant 14 : i32
    %35 = vector.broadcast %c14_i32 : i32 to vector<8x256xi32>
    %36 = arith.cmpi sle, %16, %35 : vector<8x256xi32>
    %c16_i32_9 = arith.constant 16 : i32
    %37 = vector.broadcast %c16_i32_9 : i32 to vector<8x256xi32>
    %38 = arith.cmpi sge, %32, %37 : vector<8x256xi32>
    %c240_i32 = arith.constant 240 : i32
    %39 = vector.broadcast %c240_i32 : i32 to vector<8x256xi32>
    %40 = arith.cmpi slt, %32, %39 : vector<8x256xi32>
    %cst = arith.constant 0.000000e+00 : f32
    %41 = vector.broadcast %cst : f32 to vector<8x256xf32>
    %cst_10 = arith.constant 0.000000e+00 : f32
    %42 = vector.broadcast %cst_10 : f32 to vector<4x512xf32>
    %c4 = arith.constant 4 : index
    %c0 = arith.constant 0 : index
    %43 = vector.load %arg5[%c4, %c0] : memref<8x512xf32, #tpu.memory_space<vmem>>, vector<4x512xf32>
    tpu.vector_store %arg5[%c4, %c0], %42 {strides = array<i32>} : memref<8x512xf32, #tpu.memory_space<vmem>>, vector<4x512xf32>,
    %c0_11 = arith.constant 0 : index
    %c0_12 = arith.constant 0 : index
    %c0_13 = arith.constant 0 : index
    %44 = vector.load %arg1[%c0_11, %c0_12, %c0_13] : memref<1x4x256xf32, #tpu.memory_space<vmem>>, vector<1x4x256xf32>
    %45 = vector.shape_cast %44 : vector<1x4x256xf32> to vector<4x256xf32>
    %c0_14 = arith.constant 0 : index
    %c128 = arith.constant 128 : index
    %46 = vector.load %arg5[%c0_14, %c128] : memref<8x512xf32, #tpu.memory_space<vmem>>, vector<4x256xf32>
    tpu.vector_store %arg5[%c0_14, %c128], %45 {strides = array<i32>} : memref<8x512xf32, #tpu.memory_space<vmem>>, vector<4x256xf32>,
    %c0_15 = arith.constant 0 : index
    %c0_16 = arith.constant 0 : index
    %c0_17 = arith.constant 0 : index
    %47 = vector.load %arg4[%c0_15, %c0_16, %c0_17] : memref<1x12x256xf32, #tpu.memory_space<vmem>>, vector<1x4x256xf32>
    %48 = vector.shape_cast %47 : vector<1x4x256xf32> to vector<4x256xf32>
    %49 = vector.shape_cast %45 : vector<4x256xf32> to vector<1x4x256xf32>
    tpu.vector_store %arg4[%c0_15, %c0_16, %c0_17], %49 {strides = array<i32>} : memref<1x12x256xf32, #tpu.memory_space<vmem>>, vector<1x4x256xf32>,
    %c0_18 = arith.constant 0 : index
    %c111 = arith.constant 111 : index
    %50 = vector.load %arg5[%c0_18, %c111] : memref<8x512xf32, #tpu.memory_space<vmem>>, vector<8x256xf32>
    %51 = arith.andi %38, %34 : vector<8x256xi1>
    %52 = arith.select %51, %50, %41 : vector<8x256xi1>, vector<8x256xf32>
    %c0_19 = arith.constant 0 : index
    %c0_20 = arith.constant 0 : index
    %53 = vector.load %arg6[%c0_19, %c0_20] : memref<72x256xf32, #tpu.memory_space<vmem>>, vector<8x256xf32>
    tpu.vector_store %arg6[%c0_19, %c0_20], %52 {strides = array<i32>} : memref<72x256xf32, #tpu.memory_space<vmem>>, vector<8x256xf32>,
    %c0_21 = arith.constant 0 : index
    %c112 = arith.constant 112 : index
    %54 = vector.load %arg5[%c0_21, %c112] : memref<8x512xf32, #tpu.memory_space<vmem>>, vector<8x256xf32>
    %55 = arith.select %38, %54, %41 : vector<8x256xi1>, vector<8x256xf32>
    %c8 = arith.constant 8 : index
    %c0_22 = arith.constant 0 : index
    %56 = vector.load %arg6[%c8, %c0_22] : memref<72x256xf32, #tpu.memory_space<vmem>>, vector<8x256xf32>
    tpu.vector_store %arg6[%c8, %c0_22], %55 {strides = array<i32>} : memref<72x256xf32, #tpu.memory_space<vmem>>, vector<8x256xf32>,
    %c0_23 = arith.constant 0 : index
    %c113 = arith.constant 113 : index
    %57 = vector.load %arg5[%c0_23, %c113] : memref<8x512xf32, #tpu.memory_space<vmem>>, vector<8x256xf32>
    %58 = arith.andi %38, %36 : vector<8x256xi1>
    %59 = arith.select %58, %57, %41 : vector<8x256xi1>, vector<8x256xf32>
    %c16 = arith.constant 16 : index
    %c0_24 = arith.constant 0 : index
    %60 = vector.load %arg6[%c16, %c0_24] : memref<72x256xf32, #tpu.memory_space<vmem>>, vector<8x256xf32>
    tpu.vector_store %arg6[%c16, %c0_24], %59 {strides = array<i32>} : memref<72x256xf32, #tpu.memory_space<vmem>>, vector<8x256xf32>,
    %c0_25 = arith.constant 0 : index
    %c127 = arith.constant 127 : index
    %61 = vector.load %arg5[%c0_25, %c127] : memref<8x512xf32, #tpu.memory_space<vmem>>, vector<8x256xf32>
    %62 = arith.select %34, %61, %41 : vector<8x256xi1>, vector<8x256xf32>
    %c24 = arith.constant 24 : index
    %c0_26 = arith.constant 0 : index
    %63 = vector.load %arg6[%c24, %c0_26] : memref<72x256xf32, #tpu.memory_space<vmem>>, vector<8x256xf32>
    tpu.vector_store %arg6[%c24, %c0_26], %62 {strides = array<i32>} : memref<72x256xf32, #tpu.memory_space<vmem>>, vector<8x256xf32>,
    %c0_27 = arith.constant 0 : index
    %c128_28 = arith.constant 128 : index
    %64 = vector.load %arg5[%c0_27, %c128_28] : memref<8x512xf32, #tpu.memory_space<vmem>>, vector<8x256xf32>
    %c32 = arith.constant 32 : index
    %c0_29 = arith.constant 0 : index
    %65 = vector.load %arg6[%c32, %c0_29] : memref<72x256xf32, #tpu.memory_space<vmem>>, vector<8x256xf32>
    tpu.vector_store %arg6[%c32, %c0_29], %64 {strides = array<i32>} : memref<72x256xf32, #tpu.memory_space<vmem>>, vector<8x256xf32>,
    %c0_30 = arith.constant 0 : index
    %c129 = arith.constant 129 : index
    %66 = vector.load %arg5[%c0_30, %c129] : memref<8x512xf32, #tpu.memory_space<vmem>>, vector<8x256xf32>
    %67 = arith.select %36, %66, %41 : vector<8x256xi1>, vector<8x256xf32>
    %c40 = arith.constant 40 : index
    %c0_31 = arith.constant 0 : index
    %68 = vector.load %arg6[%c40, %c0_31] : memref<72x256xf32, #tpu.memory_space<vmem>>, vector<8x256xf32>
    tpu.vector_store %arg6[%c40, %c0_31], %67 {strides = array<i32>} : memref<72x256xf32, #tpu.memory_space<vmem>>, vector<8x256xf32>,
    %c0_32 = arith.constant 0 : index
    %c143 = arith.constant 143 : index
    %69 = vector.load %arg5[%c0_32, %c143] : memref<8x512xf32, #tpu.memory_space<vmem>>, vector<8x256xf32>
    %70 = arith.andi %40, %34 : vector<8x256xi1>
    %71 = arith.select %70, %69, %41 : vector<8x256xi1>, vector<8x256xf32>
    %c48 = arith.constant 48 : index
    %c0_33 = arith.constant 0 : index
    %72 = vector.load %arg6[%c48, %c0_33] : memref<72x256xf32, #tpu.memory_space<vmem>>, vector<8x256xf32>
    tpu.vector_store %arg6[%c48, %c0_33], %71 {strides = array<i32>} : memref<72x256xf32, #tpu.memory_space<vmem>>, vector<8x256xf32>,
    %c0_34 = arith.constant 0 : index
    %c144 = arith.constant 144 : index
    %73 = vector.load %arg5[%c0_34, %c144] : memref<8x512xf32, #tpu.memory_space<vmem>>, vector<8x256xf32>
    %74 = arith.select %40, %73, %41 : vector<8x256xi1>, vector<8x256xf32>
    %c56 = arith.constant 56 : index
    %c0_35 = arith.constant 0 : index
    %75 = vector.load %arg6[%c56, %c0_35] : memref<72x256xf32, #tpu.memory_space<vmem>>, vector<8x256xf32>
    tpu.vector_store %arg6[%c56, %c0_35], %74 {strides = array<i32>} : memref<72x256xf32, #tpu.memory_space<vmem>>, vector<8x256xf32>,
    %c0_36 = arith.constant 0 : index
    %c145 = arith.constant 145 : index
    %76 = vector.load %arg5[%c0_36, %c145] : memref<8x512xf32, #tpu.memory_space<vmem>>, vector<8x256xf32>
    %77 = arith.andi %40, %36 : vector<8x256xi1>
    %78 = arith.select %77, %76, %41 : vector<8x256xi1>, vector<8x256xf32>
    %c64 = arith.constant 64 : index
    %c0_37 = arith.constant 0 : index
    %79 = vector.load %arg6[%c64, %c0_37] : memref<72x256xf32, #tpu.memory_space<vmem>>, vector<8x256xf32>
    tpu.vector_store %arg6[%c64, %c0_37], %78 {strides = array<i32>} : memref<72x256xf32, #tpu.memory_space<vmem>>, vector<8x256xf32>,
    %c0_38 = arith.constant 0 : index
    %c0_39 = arith.constant 0 : index
    %80 = vector.load %arg2[%c0_38, %c0_39] : memref<8x72xf32, #tpu.memory_space<vmem>>, vector<8x72xf32>
    %c0_40 = arith.constant 0 : index
    %c0_41 = arith.constant 0 : index
    %81 = vector.load %arg6[%c0_40, %c0_41] : memref<72x256xf32, #tpu.memory_space<vmem>>, vector<72x256xf32>
    %cst_42 = arith.constant dense<0.000000e+00> : vector<8x256xf32>
    %82 = tpu.matmul %80, %81, %cst_42 {dimension_numbers = #tpu.dot_dimension_numbers<[1], [0], [0], [1], [0, 0, 1, 1], [], []>} : vector<8x72xf32>, vector<72x256xf32>, vector<8x256xf32> -> vector<8x256xf32>
    %c0_43 = arith.constant 0 : index
    %c0_44 = arith.constant 0 : index
    %83 = vector.load %arg3[%c0_43, %c0_44] : memref<8x1xf32, #tpu.memory_space<vmem>>, vector<8x1xf32>
    %84 = vector.broadcast %83 : vector<8x1xf32> to vector<8x256xf32>
    %85 = arith.addf %82, %84 : vector<8x256xf32>
    %cst_45 = arith.constant 0.000000e+00 : f32
    %86 = vector.broadcast %cst_45 : f32 to vector<8x256xf32>
    %87 = arith.maximumf %85, %86 : vector<8x256xf32>
    %c0_46 = arith.constant 0 : index
    %c4_47 = arith.constant 4 : index
    %c0_48 = arith.constant 0 : index
    %88 = vector.load %arg4[%c0_46, %c4_47, %c0_48] : memref<1x12x256xf32, #tpu.memory_space<vmem>>, vector<1x8x256xf32>
    %89 = vector.shape_cast %88 : vector<1x8x256xf32> to vector<8x256xf32>
    %90 = vector.shape_cast %87 : vector<8x256xf32> to vector<1x8x256xf32>
    tpu.vector_store %arg4[%c0_46, %c4_47, %c0_48], %90 {strides = array<i32>} : memref<1x12x256xf32, #tpu.memory_space<vmem>>, vector<1x8x256xf32>,
    return
  }
  func.func @transform_0(%arg0: i32) -> (i32, i32, i32) {
    %c0_i32 = arith.constant 0 : i32
    %c0_i32_0 = arith.constant 0 : i32
    %c0_i32_1 = arith.constant 0 : i32
    return %arg0, %c0_i32, %c0_i32_0 : i32, i32, i32
  }
  func.func @transform_1(%arg0: i32) -> (i32, i32) {
    %c0_i32 = arith.constant 0 : i32
    %c0_i32_0 = arith.constant 0 : i32
    %c0_i32_1 = arith.constant 0 : i32
    return %c0_i32, %c0_i32_0 : i32, i32
  }
  func.func @transform_2(%arg0: i32) -> (i32, i32) {
    %c0_i32 = arith.constant 0 : i32
    %c0_i32_0 = arith.constant 0 : i32
    %c0_i32_1 = arith.constant 0 : i32
    return %c0_i32, %c0_i32_0 : i32, i32
  }
  func.func @transform_3(%arg0: i32) -> (i32, i32, i32) {
    %c0_i32 = arith.constant 0 : i32
    %c0_i32_0 = arith.constant 0 : i32
    %c0_i32_1 = arith.constant 0 : i32
    return %arg0, %c0_i32, %c0_i32_0 : i32, i32, i32
  }
}

</mosaic_0001>

<llo_original>
// kernel: tpu_custom_call.1
$region0: #{tpu_custom_call.1}
  #allocation0 [shape = 'u32[]', space=smem, size = 0x4, offset = 0x4, fixed_abs, tag = 'smem constant byte address 0x4 - core index']
  #allocation1 [shape = 'u32[144,128]{1,0:T(1,128)}', space=vmem, size = 0x12000, scoped, tag = 'internal scratch']
  #allocation2 [shape = 'f32[8,512]{1,0:T(8,128)}', space=vmem, size = 0x4000, scoped, tag = 'scratch operand']
  #allocation3 [shape = 'f32[72,256]{1,0:T(8,128)}', space=vmem, size = 0x12000, scoped, tag = 'scratch operand']
  %s0 = inlined_call_operand.hbm [shape: f32[2,4,256], index: 0, kind: input, shape index: {}]
  %s1 = inlined_call_operand.vmem [shape: f32[8,72], index: 1, kind: input, shape index: {}]
  %s2 = inlined_call_operand.vmem [shape: f32[8,1], index: 2, kind: input, shape index: {}]
  %s3 = inlined_call_operand.vmem [shape: f32[2,12,256], index: 3, kind: output, shape index: {}]
  %s4 = sld [smem:[#allocation0]]
  $region49: #{tpu_custom_call.1} parent=0
    _
  %s6 = ssub.s32 1, %s4
  %s7 = scalar_select 0, %s6, %s4
  $region1: #{tpu_custom_call.1} parent=0
    #allocation4 [shape = 'u8[8192]{0}', space=vmem, size = 0x2000, scoped, tag = 'input window, operand 0']
    #allocation5 [shape = 's32[2]{0}', space=sflag, size = 0x8, scoped, tag = 'scoped memory for tpu_custom_call.1']
    %8 = vsyncpa [#allocation5], 0
    %s9 = scalar_lea.sflag [#allocation5], 1
    %10 = vsyncpa %s9, 0
    loop: start=0, step=1, limit=4
    $region2: #{tpu_custom_call.1} parent=1 // loop_pre_header
      _
    $region3: #{tpu_custom_call.1} parent=1 // loop_header
      %s12 = sphi 0, %s16
      %p13 = scmp.ge.s32.totalorder %s12, 4
      %s22 = sphi 0, %s24
      %s25 = sphi 0, %s22
      %s26 = sphi 0, %s25
      %s42 = sphi 0, %s26
      %s46 = sphi 0, %s46
      %s48 = sphi 0, %s46
      %s49 = sphi 0, %s48
      %s63 = sphi 0, %s49
      %s67 = sphi 0, %s67
      %s69 = sphi 0, %s67
      %s70 = sphi 0, %s69
      %s84 = sphi 0, %s70
      %s90 = sphi 0, %s92
      %s93 = sphi 0, %s90
      %s94 = sphi 0, %s93
      %s110 = sphi 0, %s94
    $region4: #{tpu_custom_call.1} parent=1 // loop_header_branch
      %15 = sbr.rel (%p13) target = $region8
    $region5: #{tpu_custom_call.1} parent=1 // loop_body
      %s17 = ssub.s32 %s12, 1
      %s18 = ssub.s32 %s12, 2
      %s19 = sadd.s32 %s12, 1
      %s20 = ssub.s32 %s12, %s19
      %p21 = scmp.eq.s32.totalorder %s20, 0
      %s23 = sadd.s32 %s22, 1
      %s24 = scalar_select %p21, %s22, %s23
      %p27 = pneg %p21
      %p28 = scmp.eq.s32.totalorder %s12, 1
      %p29 = por %p27, %p28
      %p30 = scmp.ne.s32.totalorder %s22, %s25
      %p31 = scmp.eq.s32.totalorder %s12, 0
      %p32 = por %p30, %p31
      %p33 = scmp.ne.s32.totalorder %s22, %s25
      %p34 = scmp.eq.s32.totalorder %s17, 1
      %p35 = por %p33, %p34
      %p36 = scmp.ne.s32.totalorder %s25, %s26
      %p37 = scmp.eq.s32.totalorder %s17, 0
      %p38 = por %p36, %p37
      %p39 = scmp.ne.s32.totalorder %s25, %s26
      %p40 = scmp.eq.s32.totalorder %s18, 1
      %p41 = por %p39, %p40
      %p43 = scmp.ne.s32.totalorder %s26, %s42
      %p44 = scmp.eq.s32.totalorder %s18, 0
      %p45 = por %p43, %p44
      %s47 = sadd.s32 %s46, 1
      %p50 = scmp.eq.s32.totalorder %s12, 1
      %p51 = scmp.ne.s32.totalorder %s46, %s48
      %p52 = scmp.eq.s32.totalorder %s12, 0
      %p53 = por %p51, %p52
      %p54 = scmp.ne.s32.totalorder %s46, %s48
      %p55 = scmp.eq.s32.totalorder %s17, 1
      %p56 = por %p54, %p55
      %p57 = scmp.ne.s32.totalorder %s48, %s49
      %p58 = scmp.eq.s32.totalorder %s17, 0
      %p59 = por %p57, %p58
      %p60 = scmp.ne.s32.totalorder %s48, %s49
      %p61 = scmp.eq.s32.totalorder %s18, 1
      %p62 = por %p60, %p61
      %p64 = scmp.ne.s32.totalorder %s49, %s63
      %p65 = scmp.eq.s32.totalorder %s18, 0
      %p66 = por %p64, %p65
      %s68 = sadd.s32 %s67, 1
      %p71 = scmp.eq.s32.totalorder %s12, 1
      %p72 = scmp.ne.s32.totalorder %s67, %s69
      %p73 = scmp.eq.s32.totalorder %s12, 0
      %p74 = por %p72, %p73
      %p75 = scmp.ne.s32.totalorder %s67, %s69
      %p76 = scmp.eq.s32.totalorder %s17, 1
      %p77 = por %p75, %p76
      %p78 = scmp.ne.s32.totalorder %s69, %s70
      %p79 = scmp.eq.s32.totalorder %s17, 0
      %p80 = por %p78, %p79
      %p81 = scmp.ne.s32.totalorder %s69, %s70
      %p82 = scmp.eq.s32.totalorder %s18, 1
      %p83 = por %p81, %p82
      %p85 = scmp.ne.s32.totalorder %s70, %s84
      %p86 = scmp.eq.s32.totalorder %s18, 0
      %p87 = por %p85, %p86
      %s88 = ssub.s32 %s12, %s19
      %p89 = scmp.eq.s32.totalorder %s88, 0
      %s91 = sadd.s32 %s90, 1
      %s92 = scalar_select %p89, %s90, %s91
      %p95 = pneg %p89
      %p96 = scmp.eq.s32.totalorder %s12, 1
      %p97 = por %p95, %p96
      %p98 = scmp.ne.s32.totalorder %s90, %s93
      %p99 = scmp.eq.s32.totalorder %s12, 0
      %p100 = por %p98, %p99
      %p101 = scmp.ne.s32.totalorder %s90, %s93
      %p102 = scmp.eq.s32.totalorder %s17, 1
      %p103 = por %p101, %p102
      %p104 = scmp.ne.s32.totalorder %s93, %s94
      %p105 = scmp.eq.s32.totalorder %s17, 0
      %p106 = por %p104, %p105
      %p107 = scmp.ne.s32.totalorder %s93, %s94
      %p108 = scmp.eq.s32.totalorder %s18, 1
      %p109 = por %p107, %p108
      %p111 = scmp.ne.s32.totalorder %s94, %s110
      %p112 = scmp.eq.s32.totalorder %s18, 0
      %p113 = por %p111, %p112
      %p114 = scmp.le.s32.totalorder 1, %s12
      %p115 = scmp.lt.s32.totalorder %s12, 3
      %p116 = pnand %p114, %p115
      %p117 = pneg %p116
      // Predicated region
      $region9: #{tpu_custom_call.1} parent=5 // pred_check
        _
      $region10: #{tpu_custom_call.1} parent=5 // pred_check_branch
        %119 = sbr.rel (%p116) target = $region12
      $region11: #{tpu_custom_call.1} parent=5 // pred_region
        %s120 = ssub.s32 %s12, 1
        // Predicated region
        $region13: #{tpu_custom_call.1} parent=11 // pred_check
          %p121 = pneg %p59
        $region14: #{tpu_custom_call.1} parent=11 // pred_check_branch
          %123 = sbr.rel (%p121) target = $region16
        $region15: #{tpu_custom_call.1} parent=11 // pred_region
          _
        $region16: #{tpu_custom_call.1} parent=11 // pred_fallthru
          _
        // Predicated region
        $region17: #{tpu_custom_call.1} parent=11 // pred_check
          %p124 = pneg %p80
        $region18: #{tpu_custom_call.1} parent=11 // pred_check_branch
          %126 = sbr.rel (%p124) target = $region20
        $region19: #{tpu_custom_call.1} parent=11 // pred_region
          _
        $region20: #{tpu_custom_call.1} parent=11 // pred_fallthru
          _
      $region12: #{tpu_custom_call.1} parent=5 // pred_fallthru
        _
      %p127 = scmp.lt.s32.totalorder %s12, 2
      // Predicated region
      $region21: #{tpu_custom_call.1} parent=5 // pred_check
        %p128 = pneg %p127
      $region22: #{tpu_custom_call.1} parent=5 // pred_check_branch
        %130 = sbr.rel (%p128) target = $region24
      $region23: #{tpu_custom_call.1} parent=5 // pred_region
        // Predicated region
        $region25: #{tpu_custom_call.1} parent=23 // pred_check
          %p131 = pneg %p32
        $region26: #{tpu_custom_call.1} parent=23 // pred_check_branch
          %133 = sbr.rel (%p131) target = $region28
        $region27: #{tpu_custom_call.1} parent=23 // pred_region
          %s134 = sand.u32 %s22, 1
          %s135 = scalar_lea.sflag [#allocation5], %s134
          %s136 = sand.u32 %s22, 1
          %s137 = smul.addr %s136, 8
          %s138 = scalar_lea.vmem [#allocation4], %s137
          %s140 = ssub.s32 128, 128
          %141 = vsyncadd %s135, %s140
          %s142 = smul.addr %s12, 2
          %s143 = smul.addr %s142, 64
          %s144 = scalar_lea.hbm %s0, %s143
          %s146 = sshll.u32 %s138, 4
          %s147 = int_to_ptr.vmem [resolvable:$true] %s146
          %149 = dma.hbm_to_vmem [thread:$0]  %s144, 128, %s147, %s135
        $region28: #{tpu_custom_call.1} parent=23 // pred_fallthru
          _
      $region24: #{tpu_custom_call.1} parent=5 // pred_fallthru
        _
      %p150 = scmp.le.s32.totalorder 1, %s12
      %p151 = scmp.lt.s32.totalorder %s12, 3
      %p152 = pnand %p150, %p151
      %p153 = pneg %p152
      // Predicated region
      $region29: #{tpu_custom_call.1} parent=5 // pred_check
        _
      $region30: #{tpu_custom_call.1} parent=5 // pred_check_branch
        %155 = sbr.rel (%p152) target = $region32
      $region31: #{tpu_custom_call.1} parent=5 // pred_region
        %s156 = ssub.s32 %s12, 1
        %s157 = sand.u32 %s25, 1
        %s158 = scalar_lea.sflag [#allocation5], %s157
        %s159 = sand.u32 %s25, 1
        %s160 = smul.addr %s159, 8
        %s161 = scalar_lea.vmem [#allocation4], %s160
        // Predicated region
        $region33: #{tpu_custom_call.1} parent=31 // pred_check
          %p162 = pneg %p38
        $region34: #{tpu_custom_call.1} parent=31 // pred_check_branch
          %164 = sbr.rel (%p162) target = $region36
        $region35: #{tpu_custom_call.1} parent=31 // pred_region
          %165 = dma.done %s158, 128
        $region36: #{tpu_custom_call.1} parent=31 // pred_fallthru
          _
        %s166 = sand.u32 %s25, 1
        %s167 = scalar_lea.sflag [#allocation5], %s166
        %s168 = sand.u32 %s25, 1
        %s169 = smul.addr %s168, 8
        %s170 = scalar_lea.vmem [#allocation4], %s169
        %p171 = pneg %p38
        %p172 = pneg %p35
        %p173 = pneg %p59
        %p174 = pneg %p56
        %p175 = pneg %p80
        %p176 = pneg %p77
        %p177 = pneg %p106
        %p178 = pneg %p103
        %p179 = scmp.lt.s32.totalorder %s17, 1
        %s180 = scalar_select %p179, %s17, 1
        %s181 = smul.addr %s180, 4
        %s182 = smul.addr %s181, 8
        %s183 = scalar_lea.vmem %s3, %s182
        %p184 = scmp.lt.s32.totalorder %s17, 1
        %s185 = scalar_select %p184, %s17, 1
        %s186 = smul.addr %s185, 4
        %s187 = smul.addr %s186, 8
        %s188 = scalar_lea.vmem %s3, %s187
        %v189 = vlaneseq
        %v190 = vand.u32 %v189, 127
        %v191 = vadd.s32 %v190, 128
        %vm192 = vcmp.lt.s32.totalorder %v190, 0
        %v193 = vsub.s32 0, %v190
        %v194 = vsel %vm192, %v193, %v190
        %v195 = vshrl.u32 %v194, 4
        %v196 = vand.u32 %v194, 15
        %v197 = vsub.s32 0, %v196
        %v198 = vsel %vm192, %v197, %v196
        %vm199 = vcmp.lt.s32.totalorder %v191, 0
        %v200 = vsub.s32 0, %v191
        %v201 = vsel %vm199, %v200, %v191
        %v202 = vshrl.u32 %v201, 4
        %v203 = vand.u32 %v201, 15
        %v204 = vsub.s32 0, %v203
        %v205 = vsel %vm199, %v204, %v203
        %vm206 = vcmp.ne.s32.totalorder %v198, 0
        %vm207 = vcmp.ne.s32.totalorder %v205, 0
        %vm208 = vcmp.lt.s32.totalorder %v198, 0
        %vm209 = vcmp.lt.s32.totalorder %v205, 0
        %vm210 = vmand %vm208, %vm206
        %vm211 = vmand %vm209, %vm207
        %v212 = vadd.s32 %v198, 16
        %v213 = vadd.s32 %v205, 16
        %v214 = vsel %vm210, %v212, %v198
        %v215 = vsel %vm211, %v213, %v205
        %vm216 = vcmp.lt.s32.totalorder %v190, 0
        %v217 = vsub.s32 0, %v190
        %v218 = vsel %vm216, %v217, %v190
        %v219 = vshrl.u32 %v218, 8
        %v220 = vand.u32 %v218, 255
        %v221 = vsub.s32 0, %v220
        %v222 = vsel %vm216, %v221, %v220
        %vm223 = vcmp.lt.s32.totalorder %v191, 0
        %v224 = vsub.s32 0, %v191
        %v225 = vsel %vm223, %v224, %v191
        %v226 = vshrl.u32 %v225, 8
        %v227 = vand.u32 %v225, 255
        %v228 = vsub.s32 0, %v227
        %v229 = vsel %vm223, %v228, %v227
        %vm230 = vcmp.ne.s32.totalorder %v222, 0
        %vm231 = vcmp.ne.s32.totalorder %v229, 0
        %vm232 = vcmp.lt.s32.totalorder %v222, 0
        %vm233 = vcmp.lt.s32.totalorder %v229, 0
        %vm234 = vmand %vm232, %vm230
        %vm235 = vmand %vm233, %vm231
        %v236 = vadd.s32 %v222, 256
        %v237 = vadd.s32 %v229, 256
        %v238 = vsel %vm234, %v236, %v222
        %v239 = vsel %vm235, %v237, %v229
        %vm240 = vcmp.ge.s32.totalorder %v214, 1
        %vm241 = vcmp.ge.s32.totalorder %v215, 1
        %vm242 = vcmp.le.s32.totalorder %v214, 14
        %vm243 = vcmp.le.s32.totalorder %v215, 14
        %vm244 = vcmp.ge.s32.totalorder %v238, 16
        %vm245 = vcmp.ge.s32.totalorder %v239, 16
        %vm246 = vcmp.lt.s32.totalorder %v238, 240
        %vm247 = vcmp.lt.s32.totalorder %v239, 240
        %248 = vst [vmem:[#allocation2] sm:$0xf0] 0.0
        %249 = vst [vmem:[#allocation2 + $0x8] sm:$0xf0] 0.0
        %250 = vst [vmem:[#allocation2 + $0x10] sm:$0xf0] 0.0
        %251 = vst [vmem:[#allocation2 + $0x18] sm:$0xf0] 0.0
        %v252 = vld [vmem:[%s161] sm:$0xff]
        %v254 = vcombine.high %v252, %v252
        %256 = vst [vmem:[#allocation2 + $0x8] sm:$0xf] %v252
        %257 = vst [vmem:[#allocation2 + $0x10] sm:$0xf] %v254
        %258 = vst [vmem:[%s188] sm:$0xf] %v252
        %259 = vst [vmem:[%s188 + $0x8] sm:$0xf] %v254
        %v260 = vld [vmem:[#allocation2] sm:$0xff]
        %v261 = vld [vmem:[#allocation2 + $0x8] sm:$0xff]
        %v262 = vld [vmem:[#allocation2 + $0x10] sm:$0xff]
        %vm263 = vmand %vm244, %vm240
        %vm264 = vmand %vm245, %vm241
        %268 = vrot.lane.b32.xlu0 %v260, 17
        %v269 = vpop.permute.xlu0 %268
        %270 = vrot.lane.b32.xlu0 %v261, 17
        %v271 = vpop.permute.xlu0 %270
        %272 = vrot.lane.b32.xlu0 %v262, 17
        %v273 = vpop.permute.xlu0 %272
        %vm274 = vcmask 138240
        %v275 = vsel %vm274, %v269, %v271
        %v276 = vsel %vm274, %v271, %v273
        %v279 = vsel %vm263, %v275, 0.0
        %v280 = vsel %vm264, %v276, 0.0
        %281 = vst [vmem:[#allocation3] sm:$0xff] %v279
        %282 = vst [vmem:[#allocation3 + $0x8] sm:$0xff] %v280
        %v283 = vld [vmem:[#allocation2] sm:$0xff]
        %v284 = vld [vmem:[#allocation2 + $0x8] sm:$0xff]
        %v285 = vld [vmem:[#allocation2 + $0x10] sm:$0xff]
        %289 = vrot.lane.b32.xlu0 %v283, 16
        %v290 = vpop.permute.xlu0 %289
        %291 = vrot.lane.b32.xlu0 %v284, 16
        %v292 = vpop.permute.xlu0 %291
        %293 = vrot.lane.b32.xlu0 %v285, 16
        %v294 = vpop.permute.xlu0 %293
        %vm295 = vcmask 130048
        %v296 = vsel %vm295, %v290, %v292
        %v297 = vsel %vm295, %v292, %v294
        %v300 = vsel %vm244, %v296, 0.0
        %v301 = vsel %vm245, %v297, 0.0
        %302 = vst [vmem:[#allocation3 + $0x10] sm:$0xff] %v300
        %303 = vst [vmem:[#allocation3 + $0x18] sm:$0xff] %v301
        %v304 = vld [vmem:[#allocation2] sm:$0xff]
        %v305 = vld [vmem:[#allocation2 + $0x8] sm:$0xff]
        %v306 = vld [vmem:[#allocation2 + $0x10] sm:$0xff]
        %vm307 = vmand %vm244, %vm242
        %vm308 = vmand %vm245, %vm243
        %312 = vrot.lane.b32.xlu0 %v304, 15
        %v313 = vpop.permute.xlu0 %312
        %314 = vrot.lane.b32.xlu0 %v305, 15
        %v315 = vpop.permute.xlu0 %314
        %316 = vrot.lane.b32.xlu0 %v306, 15
        %v317 = vpop.permute.xlu0 %316
        %vm318 = vcmask 121856
        %v319 = vsel %vm318, %v313, %v315
        %v320 = vsel %vm318, %v315, %v317
        %v323 = vsel %vm307, %v319, 0.0
        %v324 = vsel %vm308, %v320, 0.0
        %325 = vst [vmem:[#allocation3 + $0x20] sm:$0xff] %v323
        %326 = vst [vmem:[#allocation3 + $0x28] sm:$0xff] %v324
        %v327 = vld [vmem:[#allocation2] sm:$0xff]
        %v328 = vld [vmem:[#allocation2 + $0x8] sm:$0xff]
        %v329 = vld [vmem:[#allocation2 + $0x10] sm:$0xff]
        %333 = vrot.lane.b32.xlu0 %v327, 1
        %v334 = vpop.permute.xlu0 %333
        %335 = vrot.lane.b32.xlu0 %v328, 1
        %v336 = vpop.permute.xlu0 %335
        %337 = vrot.lane.b32.xlu0 %v329, 1
        %v338 = vpop.permute.xlu0 %337
        %vm339 = vcmask 7168
        %v340 = vsel %vm339, %v334, %v336
        %v341 = vsel %vm339, %v336, %v338
        %v344 = vsel %vm240, %v340, 0.0
        %v345 = vsel %vm241, %v341, 0.0
        %346 = vst [vmem:[#allocation3 + $0x30] sm:$0xff] %v344
        %347 = vst [vmem:[#allocation3 + $0x38] sm:$0xff] %v345
        %v348 = vld [vmem:[#allocation2 + $0x8] sm:$0xff]
        %v349 = vld [vmem:[#allocation2 + $0x10] sm:$0xff]
        %350 = vst [vmem:[#allocation3 + $0x40] sm:$0xff] %v348
        %351 = vst [vmem:[#allocation3 + $0x48] sm:$0xff] %v349
        %v352 = vld [vmem:[#allocation2 + $0x8] sm:$0xff]
        %v353 = vld [vmem:[#allocation2 + $0x10] sm:$0xff]
        %v354 = vld [vmem:[#allocation2 + $0x18] sm:$0xff]
        %358 = vrot.lane.b32.xlu0 %v352, 127
        %v359 = vpop.permute.xlu0 %358
        %360 = vrot.lane.b32.xlu0 %v353, 127
        %v361 = vpop.permute.xlu0 %360
        %362 = vrot.lane.b32.xlu0 %v354, 127
        %v363 = vpop.permute.xlu0 %362
        %vm364 = vcmask 1039360
        %v365 = vsel %vm364, %v359, %v361
        %v366 = vsel %vm364, %v361, %v363
        %v369 = vsel %vm242, %v365, 0.0
        %v370 = vsel %vm243, %v366, 0.0
        %371 = vst [vmem:[#allocation3 + $0x50] sm:$0xff] %v369
        %372 = vst [vmem:[#allocation3 + $0x58] sm:$0xff] %v370
        %v373 = vld [vmem:[#allocation2 + $0x8] sm:$0xff]
        %v374 = vld [vmem:[#allocation2 + $0x10] sm:$0xff]
        %v375 = vld [vmem:[#allocation2 + $0x18] sm:$0xff]
        %vm376 = vmand %vm246, %vm240
        %vm377 = vmand %vm247, %vm241
        %381 = vrot.lane.b32.xlu0 %v373, 113
        %v382 = vpop.permute.xlu0 %381
        %383 = vrot.lane.b32.xlu0 %v374, 113
        %v384 = vpop.permute.xlu0 %383
        %385 = vrot.lane.b32.xlu0 %v375, 113
        %v386 = vpop.permute.xlu0 %385
        %vm387 = vcmask 924672
        %v388 = vsel %vm387, %v382, %v384
        %v389 = vsel %vm387, %v384, %v386
        %v392 = vsel %vm376, %v388, 0.0
        %v393 = vsel %vm377, %v389, 0.0
        %394 = vst [vmem:[#allocation3 + $0x60] sm:$0xff] %v392
        %395 = vst [vmem:[#allocation3 + $0x68] sm:$0xff] %v393
        %v396 = vld [vmem:[#allocation2 + $0x8] sm:$0xff]
        %v397 = vld [vmem:[#allocation2 + $0x10] sm:$0xff]
        %v398 = vld [vmem:[#allocation2 + $0x18] sm:$0xff]
        %402 = vrot.lane.b32.xlu0 %v396, 112
        %v403 = vpop.permute.xlu0 %402
        %404 = vrot.lane.b32.xlu0 %v397, 112
        %v405 = vpop.permute.xlu0 %404
        %406 = vrot.lane.b32.xlu0 %v398, 112
        %v407 = vpop.permute.xlu0 %406
        %vm408 = vcmask 916480
        %v409 = vsel %vm408, %v403, %v405
        %v410 = vsel %vm408, %v405, %v407
        %v413 = vsel %vm246, %v409, 0.0
        %v414 = vsel %vm247, %v410, 0.0
        %415 = vst [vmem:[#allocation3 + $0x70] sm:$0xff] %v413
        %416 = vst [vmem:[#allocation3 + $0x78] sm:$0xff] %v414
        %v417 = vld [vmem:[#allocation2 + $0x8] sm:$0xff]
        %v418 = vld [vmem:[#allocation2 + $0x10] sm:$0xff]
        %v419 = vld [vmem:[#allocation2 + $0x18] sm:$0xff]
        %vm420 = vmand %vm246, %vm242
        %vm421 = vmand %vm247, %vm243
        %425 = vrot.lane.b32.xlu0 %v417, 111
        %v426 = vpop.permute.xlu0 %425
        %427 = vrot.lane.b32.xlu0 %v418, 111
        %v428 = vpop.permute.xlu0 %427
        %429 = vrot.lane.b32.xlu0 %v419, 111
        %v430 = vpop.permute.xlu0 %429
        %vm431 = vcmask 908288
        %v432 = vsel %vm431, %v426, %v428
        %v433 = vsel %vm431, %v428, %v430
        %v436 = vsel %vm420, %v432, 0.0
        %v437 = vsel %vm421, %v433, 0.0
        %438 = vst [vmem:[#allocation3 + $0x80] sm:$0xff] %v436
        %439 = vst [vmem:[#allocation3 + $0x88] sm:$0xff] %v437
        %v440 = vld [vmem:[%s1] sm:$0xff]
        %v441 = vld [vmem:[#allocation3] sm:$0xff]
        %v442 = vld [vmem:[#allocation3 + $0x8] sm:$0xff]
        %v443 = vld [vmem:[#allocation3 + $0x10] sm:$0xff]
        %v444 = vld [vmem:[#allocation3 + $0x18] sm:$0xff]
        %v445 = vld [vmem:[#allocation3 + $0x20] sm:$0xff]
        %v446 = vld [vmem:[#allocation3 + $0x28] sm:$0xff]
        %v447 = vld [vmem:[#allocation3 + $0x30] sm:$0xff]
        %v448 = vld [vmem:[#allocation3 + $0x38] sm:$0xff]
        %v449 = vld [vmem:[#allocation3 + $0x40] sm:$0xff]
        %v450 = vld [vmem:[#allocation3 + $0x48] sm:$0xff]
        %v451 = vld [vmem:[#allocation3 + $0x50] sm:$0xff]
        %v452 = vld [vmem:[#allocation3 + $0x58] sm:$0xff]
        %v453 = vld [vmem:[#allocation3 + $0x60] sm:$0xff]
        %v454 = vld [vmem:[#allocation3 + $0x68] sm:$0xff]
        %v455 = vld [vmem:[#allocation3 + $0x70] sm:$0xff]
        %v456 = vld [vmem:[#allocation3 + $0x78] sm:$0xff]
        %v457 = vld [vmem:[#allocation3 + $0x80] sm:$0xff]
        %v458 = vld [vmem:[#allocation3 + $0x88] sm:$0xff]
        %v459 = vld [vmem:[%s2] sm:$0xff]
        %461 = vset.pattern.permute.xlu0 0
        %462 = vperm.xlu0 %461, %v459
        %v463 = vpop.permute.xlu0 %462
        %vm465 = vcmask 588800
        %v467 = vsel %vm465, %v440, 0
        %469 = vmatprep.subr.mxu0 %v442
        %470 = vmatpush1.msra.mxu0 %v441
        %471 = vmatprep.subr.mxu0 %v444
        %472 = vmatpush1.msra.mxu0 %v443
        %473 = vmatprep.subr.mxu0 %v446
        %474 = vmatpush1.msra.mxu0 %v445
        %475 = vmatprep.subr.mxu0 %v448
        %476 = vmatpush1.msra.mxu0 %v447
        %477 = vmatprep.subr.mxu0 %v450
        %478 = vmatpush1.msra.mxu0 %v449
        %479 = vmatprep.subr.mxu0 %v452
        %480 = vmatpush1.msra.mxu0 %v451
        %481 = vmatprep.subr.mxu0 %v454
        %482 = vmatpush1.msra.mxu0 %v453
        %483 = vmatprep.subr.mxu0 %v456
        %484 = vmatpush1.msra.mxu0 %v455
        %485 = vmatprep.subr.mxu0 %v458
        %486 = vmatpush1.msra.mxu0 %v457
        %487 = vmatprep.subr.mxu0 0.0
        %488 = vmatpush1.msra.mxu0 0.0
        %489 = vmatprep.subr.mxu0 0.0
        %490 = vmatpush1.msra.mxu0 0.0
        %491 = vmatprep.subr.mxu0 0.0
        %492 = vmatpush1.msra.mxu0 0.0
        %493 = vmatprep.subr.mxu0 0.0
        %494 = vmatpush1.msra.mxu0 0.0
        %495 = vmatprep.subr.mxu0 0.0
        %496 = vmatpush1.msra.mxu0 0.0
        %497 = vmatprep.subr.mxu0 0.0
        %498 = vmatpush1.msra.mxu0 0.0
        %499 = vmatprep.subr.mxu0 0.0
        %500 = vmatpush1.msra.mxu0 0.0
        %501 = vmatprep.subr.mxu0 0.0
        %502 = vmatpush1.msra.mxu0 0.0
        %503 = vmatprep.subr.mxu0 0.0
        %504 = vmatpush1.msra.mxu0 0.0
        %505 = vmatprep.subr.mxu0 0.0
        %506 = vmatpush1.msra.mxu0 0.0
        %507 = vmatprep.subr.mxu0 0.0
        %508 = vmatpush1.msra.mxu0 0.0
        %509 = vmatprep.subr.mxu0 0.0
        %510 = vmatpush1.msra.mxu0 0.0
        %511 = vmatprep.subr.mxu0 0.0
        %512 = vmatpush1.msra.mxu0 0.0
        %513 = vmatprep.subr.mxu0 0.0
        %514 = vmatpush1.msra.mxu0 0.0
        %515 = vmatprep.subr.mxu0 0.0
        %516 = vmatpush1.msra.mxu0 0.0
        %517 = vmatprep.subr.mxu0 0.0
        %518 = vmatpush1.msra.mxu0 0.0
        %519 = vmatprep.subr.mxu0 0.0
        %520 = vmatpush1.msra.mxu0 0.0
        %521 = vmatprep.subr.mxu0 0.0
        %522 = vmatpush1.msra.mxu0 0.0
        %523 = vmatprep.subr.mxu0 0.0
        %524 = vmatpush1.msra.mxu0 0.0
        %525 = vmatprep.subr.mxu0 0.0
        %526 = vmatpush1.msra.mxu0 0.0
        %527 = vmatprep.subr.mxu0 0.0
        %528 = vmatpush1.msra.mxu0 0.0
        %529 = vmatprep.subr.mxu0 0.0
        %530 = vmatpush1.msra.mxu0 0.0
        %531 = vmatprep.subr.mxu0 0.0
        %532 = vmatpush1.msra.mxu0 0.0
        %533 = vmatprep.mubr.f32.mxu0 0.0
        %534 = vmatmul.mubr.f32.gmra.mrb[0].mxu0 %v467
        %v535 = vpop.f32.mrb[0].mxu0
        %v536 = vadd.f32 %v463, %v535
        %v537 = vpop.f32.mrb[0].mxu0
        %v538 = vadd.f32 %v463, %v537
        %539 = vdwg.mxu0
        %v540 = vmax.f32 %v536, 0.0
        %v541 = vmax.f32 %v538, 0.0
        %v544 = vrot.slane %v540, 4
        %v545 = vrot.slane %v541, 4
        %548 = vst [vmem:[%s188] sm:$0xf0] %v544
        %549 = vst [vmem:[%s188 + $0x8] sm:$0xf0] %v545
        %550 = vst [vmem:[%s188 + $0x10] sm:$0xf] %v544
        %551 = vst [vmem:[%s188 + $0x18] sm:$0xf] %v545
        %p552 = scmp.lt.s32.totalorder %s17, 1
        %s553 = scalar_select %p552, %s17, 1
        %s554 = smul.addr %s553, 4
        %s555 = smul.addr %s554, 8
        %s556 = scalar_lea.vmem %s3, %s555
        // Predicated region
        $region37: #{tpu_custom_call.1} parent=31 // pred_check
          %p557 = pneg %p103
        $region38: #{tpu_custom_call.1} parent=31 // pred_check_branch
          %559 = sbr.rel (%p557) target = $region40
        $region39: #{tpu_custom_call.1} parent=31 // pred_region
          _
        $region40: #{tpu_custom_call.1} parent=31 // pred_fallthru
          _
      $region32: #{tpu_custom_call.1} parent=5 // pred_fallthru
        _
      %p560 = scmp.le.s32.totalorder 2, %s12
      // Predicated region
      $region41: #{tpu_custom_call.1} parent=5 // pred_check
        %p561 = pneg %p560
      $region42: #{tpu_custom_call.1} parent=5 // pred_check_branch
        %563 = sbr.rel (%p561) target = $region44
      $region43: #{tpu_custom_call.1} parent=5 // pred_region
        %s564 = ssub.s32 %s12, 2
        // Predicated region
        $region45: #{tpu_custom_call.1} parent=43 // pred_check
          %p565 = pneg %p109
        $region46: #{tpu_custom_call.1} parent=43 // pred_check_branch
          %567 = sbr.rel (%p565) target = $region48
        $region47: #{tpu_custom_call.1} parent=43 // pred_region
          %p568 = scmp.lt.s32.totalorder %s18, 1
          %s569 = scalar_select %p568, %s18, 1
          %s570 = smul.addr %s569, 4
          %s571 = smul.addr %s570, 8
          %s572 = scalar_lea.vmem %s3, %s571
        $region48: #{tpu_custom_call.1} parent=43 // pred_fallthru
          _
      $region44: #{tpu_custom_call.1} parent=5 // pred_fallthru
        _
    $region6: #{tpu_custom_call.1} parent=1 // loop_footer
      %s16 = sadd.s32 1, %s12
    $region7: #{tpu_custom_call.1} parent=1 // loop_footer_branch
      %11 = sbr.rel target = $region3
    $region8: #{tpu_custom_call.1} parent=1 // loop_exit
      _
    %573 = vsyncpa [#allocation5], 1
    %s574 = scalar_lea.sflag [#allocation5], 1
    %575 = vsyncpa %s574, 1

</llo_original>
